<compile_context>
chip_gen: v5e
topology: v5e:2x2
jax: 0.10.0
libtpu: 0.0.40
codegen_flags: <defaults>
</compile_context>

<pallas_src>
import functools

import jax
import jax.numpy as jnp
from jax.experimental import pallas as pl
from jax.experimental.pallas import tpu as pltpu


def _round_up(v, m):
    return ((v + m - 1) // m) * m


def _head_kernel(x_ref, w1_ref, b1_ref, w2_ref, b2_ref, o_ref, acc_ref,
                 *, n_chunks, chunk):
    # Cast the activation tile once to the first weight's dtype so bf16 weights
    # hit the native bf16 MXU path (accumulation stays f32 via
    # preferred_element_type); avoids silent f32 promotion for mixed dtypes.
    x = x_ref[...].astype(w1_ref.dtype)
    acc_ref[...] = jnp.zeros_like(acc_ref)
    # Chunk the hidden-out dimension: EUP tanh / VPU bias-add of slab j overlap
    # MXU pushes of slab j+1 (different VLIW slots); h stays [TB, chunk].
    for j in range(n_chunks):                 # static trip count -> static slices
        lo = j * chunk
        h = jnp.dot(x, w1_ref[:, lo:lo + chunk],
                    preferred_element_type=jnp.float32)
        h = jnp.tanh(h + b1_ref[:, lo:lo + chunk].astype(jnp.float32))
        acc_ref[...] += jnp.dot(h.astype(w2_ref.dtype),
                                w2_ref[lo:lo + chunk, :],
                                preferred_element_type=jnp.float32)
    out = acc_ref[...] + b2_ref[...].astype(jnp.float32)
    o_ref[...] = out.astype(o_ref.dtype)


def bert_nonlinear_classification_head(x, w1, b1, w2, b2, *, block_b=1024):
    """x: [B, H]; w1: [H, H]; b1: [H]; w2: [H, L]; b2: [L] -> [B, L]."""
    B, H = x.shape
    H_in, L = w2.shape
    assert w1.shape == (H, H) and b1.shape == (H,)
    assert H_in == H and b2.shape == (L,)

    # Lane-dense out_proj: pad num_labels to a multiple of 128 (sliced off below).
    L_pad = _round_up(L, 128)
    if L_pad != L:
        w2 = jnp.pad(w2, ((0, 0), (0, L_pad - L)))
        b2 = jnp.pad(b2, (0, L_pad - L))
    b1_2d = b1.reshape(1, H)
    b2_2d = b2.reshape(1, L_pad)

    # Hidden-out chunk size: largest lane-aligned divisor of H (else whole H).
    chunk = next((c for c in (512, 256, 128) if H % c == 0), H)
    n_chunks = H // chunk

    # Batch tile: packed-sublane multiple when tiling; full B for a single block.
    sub = {4: 8, 2: 16, 1: 32}.get(x.dtype.itemsize, 8)
    if B > block_b:
        TB = _round_up(block_b, sub)
    elif B > 256:
        # >=2 grid steps so the "parallel" batch axis shards over both TCs (v7x).
        TB = max(256, _round_up(pl.cdiv(B, 2), sub))
    else:
        TB = B                              # single block == full batch dim

    # VMEM budget: derive from actual buffer sizes, cap per generation.
    try:
        vmem_cap = int(pltpu.get_tpu_info().vmem_capacity_bytes)
    except Exception:                       # conservative default (v7x: 64 MiB/TC)
        vmem_cap = 64 * 1024 * 1024
    cap = (vmem_cap * 3) // 4

    def need_bytes(tb):
        return (2 * tb * H * x.dtype.itemsize          # x tile, double-buffered
                + 2 * tb * L_pad * x.dtype.itemsize    # out tile, double-buffered
                + H * H * w1.dtype.itemsize            # W1 (single-buffered)
                + H * L_pad * w2.dtype.itemsize        # W2 (single-buffered)
                + H * b1.dtype.itemsize + L_pad * b2.dtype.itemsize
                + tb * L_pad * 4)                      # f32 accumulator scratch

    headroom = 4 * 1024 * 1024
    while need_bytes(TB) + headroom > cap and TB > sub:
        TB = max(sub, _round_up(TB // 2, sub))
    vmem_limit = min(max(need_bytes(TB) + headroom, 16 * 1024 * 1024), cap)

    grid = (pl.cdiv(B, TB),)

    cost = pl.CostEstimate(
        flops=2 * B * H * H + 2 * B * H * L_pad,
        transcendentals=B * H,
        bytes_accessed=(x.size * x.dtype.itemsize
                        + w1.size * w1.dtype.itemsize
                        + w2.size * w2.dtype.itemsize
                        + b1.size * b1.dtype.itemsize
                        + b2.size * b2.dtype.itemsize
                        + B * L_pad * x.dtype.itemsize),
    )

    kernel = functools.partial(_head_kernel, n_chunks=n_chunks, chunk=chunk)

    out = pl.pallas_call(
        kernel,
        out_shape=jax.ShapeDtypeStruct((B, L_pad), x.dtype),
        grid=grid,
        in_specs=[
            pl.BlockSpec((TB, H), lambda i: (i, 0)),        # x: tiled over batch
            pl.BlockSpec((H, H), lambda i: (0, 0),          # w1: grid-invariant
                         pipeline_mode=pl.Buffered(buffer_count=1)),
            pl.BlockSpec((1, H), lambda i: (0, 0),          # b1
                         pipeline_mode=pl.Buffered(buffer_count=1)),
            pl.BlockSpec((H, L_pad), lambda i: (0, 0),      # w2
                         pipeline_mode=pl.Buffered(buffer_count=1)),
            pl.BlockSpec((1, L_pad), lambda i: (0, 0),      # b2
                         pipeline_mode=pl.Buffered(buffer_count=1)),
        ],
        out_specs=pl.BlockSpec((TB, L_pad), lambda i: (i, 0)),
        scratch_shapes=[pltpu.VMEM((TB, L_pad), jnp.float32)],
        compiler_params=pltpu.CompilerParams(
            dimension_semantics=("parallel",),   # shard batch tiles across TCs
            vmem_limit_bytes=vmem_limit,
        ),
        cost_estimate=cost,
    )(x, w1, b1_2d, w2, b2_2d)

    # Strip the lane padding of num_labels.
    return out[:, :L] if L_pad != L else out


def init_params(key, hidden_size, num_labels, dtype=jnp.float32):
    """Deterministic init matching nn.Linear's U(-1/sqrt(fan_in), 1/sqrt(fan_in)).

    Weights are stored transposed relative to PyTorch: [in_features, out_features].
    """
    k1, k2, k3, k4 = jax.random.split(key, 4)
    bound = 1.0 / (hidden_size ** 0.5)
    w1 = jax.random.uniform(k1, (hidden_size, hidden_size), dtype,
                            minval=-bound, maxval=bound)
    b1 = jax.random.uniform(k2, (hidden_size,), dtype,
                            minval=-bound, maxval=bound)
    w2 = jax.random.uniform(k3, (hidden_size, num_labels), dtype,
                            minval=-bound, maxval=bound)
    b2 = jax.random.uniform(k4, (num_labels,), dtype,
                            minval=-bound, maxval=bound)
    return w1, b1, w2, b2


if __name__ == "__main__":
    batch = 8
    hidden_size = 32
    num_labels = 4

    key = jax.random.PRNGKey(0)
    kx, kp = jax.random.split(key)
    x = jax.random.normal(kx, (batch, hidden_size), dtype=jnp.float32)
    w1, b1, w2, b2 = init_params(kp, hidden_size, num_labels)

    # --- f32 path (tight tolerance against pure-JAX reference) ---
    out = bert_nonlinear_classification_head(x, w1, b1, w2, b2)
    out = jax.block_until_ready(out)
    ref = jnp.tanh(x @ w1 + b1) @ w2 + b2
    assert out.shape == (batch, num_labels)
    assert jnp.allclose(out, ref, atol=1e-5, rtol=1e-5)

    # --- bf16-weight path (native bf16 MXU, f32 accumulate; loose tolerance) ---
    out_bf16 = bert_nonlinear_classification_head(
        x.astype(jnp.bfloat16),
        w1.astype(jnp.bfloat16), b1,
        w2.astype(jnp.bfloat16), b2)
    out_bf16 = jax.block_until_ready(out_bf16)
    assert out_bf16.shape == (batch, num_labels)
    assert jnp.allclose(out_bf16.astype(jnp.float32), ref, atol=1e-1, rtol=1e-1)

    print("KERNEL_OK")
</pallas_src>

<mosaic_0001>
module attributes {stable_mosaic.version = 11 : i64} {
  func.func @_head_kernel(%arg0: i32, %arg1: memref<8x32xf32, #tpu.memory_space<vmem>>, %arg2: memref<32x32xf32, #tpu.memory_space<vmem>>, %arg3: memref<1x32xf32, #tpu.memory_space<vmem>>, %arg4: memref<32x128xf32, #tpu.memory_space<vmem>>, %arg5: memref<1x128xf32, #tpu.memory_space<vmem>>, %arg6: memref<8x128xf32, #tpu.memory_space<vmem>>, %arg7: memref<8x128xf32, #tpu.memory_space<vmem>>) attributes {dimension_semantics = [#tpu.dimension_semantics<parallel>], iteration_bounds = array<i64: 1>, scalar_prefetch = 0 : i64, scratch_operands = 1 : i64, tpu.core_type = #tpu.core_type<tc>, window_params = [{transform_indices = @transform_0, window_bounds = array<i64: 8, 32>}, {pipeline_mode = #tpu.pipeline_mode<synchronous>, transform_indices = @transform_1, window_bounds = array<i64: 32, 32>}, {pipeline_mode = #tpu.pipeline_mode<synchronous>, transform_indices = @transform_2, window_bounds = array<i64: 1, 32>}, {pipeline_mode = #tpu.pipeline_mode<synchronous>, transform_indices = @transform_3, window_bounds = array<i64: 32, 128>}, {pipeline_mode = #tpu.pipeline_mode<synchronous>, transform_indices = @transform_4, window_bounds = array<i64: 1, 128>}, {transform_indices = @transform_5, window_bounds = array<i64: 8, 128>}]} {
    %c0 = arith.constant 0 : index
    %c0_0 = arith.constant 0 : index
    %0 = vector.load %arg1[%c0, %c0_0] : memref<8x32xf32, #tpu.memory_space<vmem>>, vector<8x32xf32>
    %cst = arith.constant 0.000000e+00 : f32
    %1 = vector.broadcast %cst : f32 to vector<8x128xf32>
    %c0_1 = arith.constant 0 : index
    %c0_2 = arith.constant 0 : index
    %2 = vector.load %arg7[%c0_1, %c0_2] : memref<8x128xf32, #tpu.memory_space<vmem>>, vector<8x128xf32>
    tpu.vector_store %arg7[%c0_1, %c0_2], %1 {strides = array<i32>} : memref<8x128xf32, #tpu.memory_space<vmem>>, vector<8x128xf32>,
    %c0_3 = arith.constant 0 : index
    %c0_4 = arith.constant 0 : index
    %3 = vector.load %arg2[%c0_3, %c0_4] : memref<32x32xf32, #tpu.memory_space<vmem>>, vector<32x32xf32>
    %cst_5 = arith.constant dense<0.000000e+00> : vector<8x32xf32>
    %4 = tpu.matmul %0, %3, %cst_5 {dimension_numbers = #tpu.dot_dimension_numbers<[1], [0], [0], [1], [0, 0, 1, 1], [], []>} : vector<8x32xf32>, vector<32x32xf32>, vector<8x32xf32> -> vector<8x32xf32>
    %c0_6 = arith.constant 0 : index
    %c0_7 = arith.constant 0 : index
    %5 = vector.load %arg3[%c0_6, %c0_7] : memref<1x32xf32, #tpu.memory_space<vmem>>, vector<1x32xf32>
    %6 = vector.broadcast %5 : vector<1x32xf32> to vector<8x32xf32>
    %7 = arith.addf %4, %6 : vector<8x32xf32>
    %8 = math.tanh %7 : vector<8x32xf32>
    %c0_8 = arith.constant 0 : index
    %c0_9 = arith.constant 0 : index
    %9 = vector.load %arg7[%c0_8, %c0_9] : memref<8x128xf32, #tpu.memory_space<vmem>>, vector<8x128xf32>
    %c0_10 = arith.constant 0 : index
    %c0_11 = arith.constant 0 : index
    %10 = vector.load %arg4[%c0_10, %c0_11] : memref<32x128xf32, #tpu.memory_space<vmem>>, vector<32x128xf32>
    %cst_12 = arith.constant dense<0.000000e+00> : vector<8x128xf32>
    %11 = tpu.matmul %8, %10, %cst_12 {dimension_numbers = #tpu.dot_dimension_numbers<[1], [0], [0], [1], [0, 0, 1, 1], [], []>} : vector<8x32xf32>, vector<32x128xf32>, vector<8x128xf32> -> vector<8x128xf32>
    %12 = arith.addf %9, %11 : vector<8x128xf32>
    %c0_13 = arith.constant 0 : index
    %c0_14 = arith.constant 0 : index
    %13 = vector.load %arg7[%c0_13, %c0_14] : memref<8x128xf32, #tpu.memory_space<vmem>>, vector<8x128xf32>
    tpu.vector_store %arg7[%c0_13, %c0_14], %12 {strides = array<i32>} : memref<8x128xf32, #tpu.memory_space<vmem>>, vector<8x128xf32>,
    %c0_15 = arith.constant 0 : index
    %c0_16 = arith.constant 0 : index
    %14 = vector.load %arg7[%c0_15, %c0_16] : memref<8x128xf32, #tpu.memory_space<vmem>>, vector<8x128xf32>
    %c0_17 = arith.constant 0 : index
    %c0_18 = arith.constant 0 : index
    %15 = vector.load %arg5[%c0_17, %c0_18] : memref<1x128xf32, #tpu.memory_space<vmem>>, vector<1x128xf32>
    %16 = vector.broadcast %15 : vector<1x128xf32> to vector<8x128xf32>
    %17 = arith.addf %14, %16 : vector<8x128xf32>
    %c0_19 = arith.constant 0 : index
    %c0_20 = arith.constant 0 : index
    %18 = vector.load %arg6[%c0_19, %c0_20] : memref<8x128xf32, #tpu.memory_space<vmem>>, vector<8x128xf32>
    tpu.vector_store %arg6[%c0_19, %c0_20], %17 {strides = array<i32>} : memref<8x128xf32, #tpu.memory_space<vmem>>, vector<8x128xf32>,
    return
  }
  func.func @transform_0(%arg0: i32) -> (i32, i32) {
    %c0_i32 = arith.constant 0 : i32
    %c0_i32_0 = arith.constant 0 : i32
    return %arg0, %c0_i32 : i32, i32
  }
  func.func @transform_1(%arg0: i32) -> (i32, i32) {
    %c0_i32 = arith.constant 0 : i32
    %c0_i32_0 = arith.constant 0 : i32
    %c0_i32_1 = arith.constant 0 : i32
    return %c0_i32, %c0_i32_0 : i32, i32
  }
  func.func @transform_2(%arg0: i32) -> (i32, i32) {
    %c0_i32 = arith.constant 0 : i32
    %c0_i32_0 = arith.constant 0 : i32
    %c0_i32_1 = arith.constant 0 : i32
    return %c0_i32, %c0_i32_0 : i32, i32
  }
  func.func @transform_3(%arg0: i32) -> (i32, i32) {
    %c0_i32 = arith.constant 0 : i32
    %c0_i32_0 = arith.constant 0 : i32
    %c0_i32_1 = arith.constant 0 : i32
    return %c0_i32, %c0_i32_0 : i32, i32
  }
  func.func @transform_4(%arg0: i32) -> (i32, i32) {
    %c0_i32 = arith.constant 0 : i32
    %c0_i32_0 = arith.constant 0 : i32
    %c0_i32_1 = arith.constant 0 : i32
    return %c0_i32, %c0_i32_0 : i32, i32
  }
  func.func @transform_5(%arg0: i32) -> (i32, i32) {
    %c0_i32 = arith.constant 0 : i32
    %c0_i32_0 = arith.constant 0 : i32
    return %arg0, %c0_i32 : i32, i32
  }
}

</mosaic_0001>

<llo_original>
// kernel: tpu_custom_call.1
$region0: #{tpu_custom_call.1}
  #allocation0 [shape = 'u32[]', space=smem, size = 0x4, offset = 0x4, fixed_abs, tag = 'smem constant byte address 0x4 - core index']
  #allocation1 [shape = 'u32[72,128]{1,0:T(1,128)}', space=vmem, size = 0x9000, scoped, tag = 'internal scratch']
  #allocation2 [shape = 'f32[8,128]{1,0:T(8,128)}', space=vmem, size = 0x1000, scoped, tag = 'scratch operand']
  %s0 = inlined_call_operand.hbm [shape: f32[8,32], index: 0, kind: input, shape index: {}]
  %s1 = inlined_call_operand.hbm [shape: f32[32,32], index: 1, kind: input, shape index: {}]
  %s2 = inlined_call_operand.vmem [shape: f32[1,32], index: 2, kind: input, shape index: {}]
  %s3 = inlined_call_operand.hbm [shape: f32[32,128], index: 3, kind: input, shape index: {}]
  %s4 = inlined_call_operand.vmem [shape: f32[1,128], index: 4, kind: input, shape index: {}]
  %s5 = inlined_call_operand.hbm [shape: f32[8,128], index: 5, kind: output, shape index: {}]
  %s6 = sld [smem:[#allocation0]]
  $region42: #{tpu_custom_call.1} parent=0
    _
  %s8 = ssub.s32 1, %s6
  %s9 = scalar_select 0, %s8, %s6
  $region1: #{tpu_custom_call.1} parent=0
    #allocation3 [shape = 'u8[4096]{0}', space=vmem, size = 0x1000, scoped, tag = 'input window, operand 0, single buffered']
    #allocation4 [shape = 's32[1]{0}', space=sflag, size = 0x4, scoped, tag = 'scoped memory for tpu_custom_call.1']
    #allocation5 [shape = 's32[1]{0}', space=sflag, size = 0x4, scoped, tag = 'scoped memory for tpu_custom_call.1']
    #allocation6 [shape = 'u8[16384]{0}', space=vmem, size = 0x4000, scoped, tag = 'input window, operand 1, single buffered']
    #allocation7 [shape = 's32[1]{0}', space=sflag, size = 0x4, scoped, tag = 'scoped memory for tpu_custom_call.1']
    #allocation8 [shape = 'u8[16384]{0}', space=vmem, size = 0x4000, scoped, tag = 'input window, operand 3, single buffered']
    #allocation9 [shape = 'u8[4096]{0}', space=vmem, size = 0x1000, scoped, tag = 'output window, operand 0, single buffered']
    %10 = vsyncpa [#allocation4], 0
    %11 = vsyncpa [#allocation7], 0
    %12 = vsyncpa [#allocation5], 0
    // Predicated region
    $region2: #{tpu_custom_call.1} parent=1 // pred_check
      _
    $region3: #{tpu_custom_call.1} parent=1 // pred_check_branch
      %14 = sbr.rel (0) target = $region5
    $region4: #{tpu_custom_call.1} parent=1 // pred_region
      %16 = vsyncadd [#allocation4], 0
      %s18 = sshll.u32 %s0, 4
      %s19 = int_to_ptr.hbm [resolvable:$true] %s18
      %s20 = sshll.u32 [#allocation3], 4
      %s21 = int_to_ptr.vmem [resolvable:$true] %s20
      %23 = dma.hbm_to_vmem [thread:$0]  %s19, 128, %s21, [#allocation4]
    $region5: #{tpu_custom_call.1} parent=1 // pred_fallthru
      _
    // Predicated region
    $region6: #{tpu_custom_call.1} parent=1 // pred_check
      _
    $region7: #{tpu_custom_call.1} parent=1 // pred_check_branch
      %25 = sbr.rel (0) target = $region9
    $region8: #{tpu_custom_call.1} parent=1 // pred_region
      %27 = vsyncadd [#allocation7], 0
      %s28 = sshll.u32 %s1, 4
      %s29 = int_to_ptr.hbm [resolvable:$true] %s28
      %s30 = sshll.u32 [#allocation6], 4
      %s31 = int_to_ptr.vmem [resolvable:$true] %s30
      %36 = dma.hbm_to_vmem [thread:$0]  %s29, 512, %s31, [#allocation7], 128, 128, 8
    $region9: #{tpu_custom_call.1} parent=1 // pred_fallthru
      _
    // Predicated region
    $region10: #{tpu_custom_call.1} parent=1 // pred_check
      _
    $region11: #{tpu_custom_call.1} parent=1 // pred_check_branch
      %38 = sbr.rel (0) target = $region13
    $region12: #{tpu_custom_call.1} parent=1 // pred_region
      _
    $region13: #{tpu_custom_call.1} parent=1 // pred_fallthru
      _
    // Predicated region
    $region14: #{tpu_custom_call.1} parent=1 // pred_check
      _
    $region15: #{tpu_custom_call.1} parent=1 // pred_check_branch
      %40 = sbr.rel (0) target = $region17
    $region16: #{tpu_custom_call.1} parent=1 // pred_region
      %42 = vsyncadd [#allocation7], 0
      %s43 = sshll.u32 %s3, 4
      %s44 = int_to_ptr.hbm [resolvable:$true] %s43
      %s45 = sshll.u32 [#allocation8], 4
      %s46 = int_to_ptr.vmem [resolvable:$true] %s45
      %51 = dma.hbm_to_vmem [thread:$0]  %s44, 512, %s46, [#allocation7], 128, 128, 8
    $region17: #{tpu_custom_call.1} parent=1 // pred_fallthru
      _
    // Predicated region
    $region18: #{tpu_custom_call.1} parent=1 // pred_check
      _
    $region19: #{tpu_custom_call.1} parent=1 // pred_check_branch
      %53 = sbr.rel (0) target = $region21
    $region20: #{tpu_custom_call.1} parent=1 // pred_region
      _
    $region21: #{tpu_custom_call.1} parent=1 // pred_fallthru
      _
    // Predicated region
    $region22: #{tpu_custom_call.1} parent=1 // pred_check
      _
    $region23: #{tpu_custom_call.1} parent=1 // pred_check_branch
      %55 = sbr.rel (0) target = $region25
    $region24: #{tpu_custom_call.1} parent=1 // pred_region
      %57 = dma.done [#allocation4], 128
    $region25: #{tpu_custom_call.1} parent=1 // pred_fallthru
      _
    // Predicated region
    $region26: #{tpu_custom_call.1} parent=1 // pred_check
      _
    $region27: #{tpu_custom_call.1} parent=1 // pred_check_branch
      %59 = sbr.rel (0) target = $region29
    $region28: #{tpu_custom_call.1} parent=1 // pred_region
      %61 = dma.done [#allocation7], 512
    $region29: #{tpu_custom_call.1} parent=1 // pred_fallthru
      _
    // Predicated region
    $region30: #{tpu_custom_call.1} parent=1 // pred_check
      _
    $region31: #{tpu_custom_call.1} parent=1 // pred_check_branch
      %63 = sbr.rel (0) target = $region33
    $region32: #{tpu_custom_call.1} parent=1 // pred_region
      %65 = dma.done [#allocation7], 512
    $region33: #{tpu_custom_call.1} parent=1 // pred_fallthru
      _
    %v66 = vld [vmem:[#allocation3] sm:$0xff]
    %67 = vst [vmem:[#allocation2] sm:$0xff] 0.0
    %v68 = vld [vmem:[#allocation6] sm:$0xff]
    %v69 = vld [vmem:[#allocation6 + $0x8] sm:$0xff]
    %v70 = vld [vmem:[#allocation6 + $0x10] sm:$0xff]
    %v71 = vld [vmem:[#allocation6 + $0x18] sm:$0xff]
    %v72 = vld [vmem:[%s2] sm:$0x1]
    %v74 = vperm.slane %v72, 0
    %vm76 = vcmask 261120
    %v78 = vsel %vm76, %v66, 0
    %80 = vmatpush.msra.mxu0 0.0
    %81 = vmatpush.msra.mxu0 0.0
    %82 = vmatpush.msra.mxu0 0.0
    %83 = vmatpush.msra.mxu0 0.0
    %84 = vmatpush.msra.mxu0 0.0
    %85 = vmatpush.msra.mxu0 0.0
    %86 = vmatpush.msra.mxu0 0.0
    %87 = vmatpush.msra.mxu0 0.0
    %88 = vmatpush.msra.mxu0 0.0
    %89 = vmatpush.msra.mxu0 0.0
    %90 = vmatpush.msra.mxu0 0.0
    %91 = vmatpush.msra.mxu0 0.0
    %92 = vmatpush.msra.mxu0 %v71
    %93 = vmatpush.msra.mxu0 %v70
    %94 = vmatpush.msra.mxu0 %v69
    %95 = vmatpush.msra.mxu0 %v68
    %96 = vmatmul.f32.gmra.mxu0 %v78
    %v97 = vpop.f32.mrf.mxu0
    %v98 = vadd.f32 %v74, %v97
    %99 = vdwg.mxu0
    %v100 = vtanh.pop %v98
    %v101 = vld [vmem:[#allocation2] sm:$0xff]
    %v102 = vld [vmem:[#allocation8] sm:$0xff]
    %v103 = vld [vmem:[#allocation8 + $0x8] sm:$0xff]
    %v104 = vld [vmem:[#allocation8 + $0x10] sm:$0xff]
    %v105 = vld [vmem:[#allocation8 + $0x18] sm:$0xff]
    %v107 = vsel %vm76, %v100, 0
    %109 = vmatpush.msra.mxu0 0.0
    %110 = vmatpush.msra.mxu0 0.0
    %111 = vmatpush.msra.mxu0 0.0
    %112 = vmatpush.msra.mxu0 0.0
    %113 = vmatpush.msra.mxu0 0.0
    %114 = vmatpush.msra.mxu0 0.0
    %115 = vmatpush.msra.mxu0 0.0
    %116 = vmatpush.msra.mxu0 0.0
    %117 = vmatpush.msra.mxu0 0.0
    %118 = vmatpush.msra.mxu0 0.0
    %119 = vmatpush.msra.mxu0 0.0
    %120 = vmatpush.msra.mxu0 0.0
    %121 = vmatpush.msra.mxu0 %v105
    %122 = vmatpush.msra.mxu0 %v104
    %123 = vmatpush.msra.mxu0 %v103
    %124 = vmatpush.msra.mxu0 %v102
    %125 = vmatmul.f32.gmra.mxu0 %v107
    %v126 = vpop.f32.mrf.mxu0
    %v127 = vadd.f32 0.0, %v126
    %128 = vdwg.mxu0
    %v129 = vadd.f32 %v101, %v127
    %130 = vst [vmem:[#allocation2] sm:$0xff] %v129
    %v131 = vld [vmem:[#allocation2] sm:$0xff]
    %v132 = vld [vmem:[%s4] sm:$0x1]
    %v134 = vperm.slane %v132, 0
    %v136 = vadd.f32 %v131, %v134
    %137 = vst [vmem:[#allocation9] sm:$0xff] %v136
    // Predicated region
    $region34: #{tpu_custom_call.1} parent=1 // pred_check
      _
    $region35: #{tpu_custom_call.1} parent=1 // pred_check_branch
      %139 = sbr.rel (0) target = $region37
    $region36: #{tpu_custom_call.1} parent=1 // pred_region
      %141 = vsyncadd [#allocation5], 0
      %s143 = sshll.u32 [#allocation9], 4
      %s144 = int_to_ptr.vmem [resolvable:$true] %s143
      %s145 = sshll.u32 %s5, 4
      %s146 = int_to_ptr.hbm [resolvable:$true] %s145
      %148 = dma.vmem_to_hbm [thread:$0]  %s144, 128, %s146, [#allocation5]
    $region37: #{tpu_custom_call.1} parent=1 // pred_fallthru
      _
    // Predicated region
    $region38: #{tpu_custom_call.1} parent=1 // pred_check
      _
    $region39: #{tpu_custom_call.1} parent=1 // pred_check_branch
      %150 = sbr.rel (0) target = $region41
    $region40: #{tpu_custom_call.1} parent=1 // pred_region
      %152 = dma.done [#allocation5], 128
    $region41: #{tpu_custom_call.1} parent=1 // pred_fallthru
      _
    %153 = vsyncpa [#allocation4], 1
    %154 = vsyncpa [#allocation7], 1
    %155 = vsyncpa [#allocation5], 1

</llo_original>
